<compile_context>
chip_gen: v7x
topology: tpu7x:2x2x1
jax: 0.10.0
libtpu: 0.0.40
codegen_flags: <defaults>
</compile_context>

<pallas_src>
import functools

import jax
import jax.numpy as jnp
from jax.experimental import pallas as pl
from jax.experimental.pallas import tpu as pltpu


def _clamp_kernel(x_ref, o_ref, *, value):
    x = x_ref[...]
    v = jnp.asarray(value, dtype=x.dtype)
    o_ref[...] = jnp.clip(x, -v, v)


def _vmem_budget():
    """Returns (per-tile byte budget, scoped-VMEM limit) per TPU generation."""
    try:
        cap = int(pltpu.get_tpu_info().vmem_capacity_bytes)
    except Exception:
        cap = 0
    if cap >= (128 << 20):
        # v5e / v6e: 128 MiB physical VMEM. 6 MiB tiles double-buffered for
        # input + output are ~24 MiB live, so raise v5e's 16 MiB scoped default.
        return 6 << 20, 64 << 20
    # v7x (64 MiB physical / 32 MiB scoped default) or unknown: stay conservative.
    # 4 MiB tiles -> ~16 MiB live, well within a 32 MiB scoped limit everywhere.
    return 4 << 20, 32 << 20


def _choose_block_rows(rows, width, itemsize, sub, block_bytes):
    """Pick a sublane-aligned row-block size (all static Python ints).

    Goals for an HBM-bandwidth-bound streaming kernel:
      * tiles near `block_bytes` so the ~0.35 us/step grid overhead stays small,
      * never a single grid step (no pipelining); prefer >= 4 steps so each
        v7x TensorCore gets pipelined work,
      * an even step count so the 2-TC "parallel" split has no idle tail
        (a no-op on single-TC v5e/v6e),
      * block_rows a multiple of `sub` unless it equals the full extent.
    """
    if rows <= sub:
        return rows                        # tiny slab: single full-extent block

    max_steps = rows // sub                # most sub-aligned blocks available

    # Step count implied by the per-tile byte budget.
    budget_rows = max(sub, ((block_bytes // itemsize) // width) // sub * sub)
    steps = pl.cdiv(rows, min(budget_rows, rows))

    # Restore pipelining / megacore utilisation for slabs that fit one tile.
    steps = max(steps, min(4, max_steps))
    if steps % 2 and steps < max_steps:    # prefer an even split
        steps += 1
    steps = min(steps, max_steps)

    block_rows = pl.cdiv(pl.cdiv(rows, steps), sub) * sub
    return min(block_rows, rows)


def clamp_pallas(logx, y=None, value: float = 6.0, *, min_pallas_bytes: int = 1 << 20):
    """Equivalent of Clamp.forward: returns (clip(logx, -value, value), y)."""
    value = float(value)
    dtype = logx.dtype
    itemsize = jnp.dtype(dtype).itemsize
    n = logx.size

    if n == 0:
        return logx, y

    def xla_clip(x):
        v = jnp.asarray(value, dtype=dtype)
        return jnp.clip(x, -v, v)

    # Fast path: for tiny tensors a kernel launch + reshapes is pure overhead.
    if n * itemsize <= min_pallas_bytes:
        return xla_clip(logx), y

    LANE = 128

    # Widest lane-dense last dim (multiple of 128, <= 8192) dividing n exactly,
    # so the flat 2-D view needs no padding at all.
    width = None
    for w in range(8192, LANE - 1, -LANE):
        if n % w == 0:
            width = w
            break
    if width is None:
        # n not a multiple of 128: padding + re-slicing would add two extra
        # full HBM passes around a 2-pass kernel, so the fused XLA clip wins.
        return xla_clip(logx), y

    rows = n // width

    # Dtype-aware sublane granularity: 8 for f32, 16 for bf16, 32 for int8/fp8.
    sub = max(8, 32 // itemsize)

    block_bytes, vmem_limit = _vmem_budget()
    block_rows = _choose_block_rows(rows, width, itemsize, sub, block_bytes)
    grid = (pl.cdiv(rows, block_rows),)

    kernel = functools.partial(_clamp_kernel, value=value)

    out2d = pl.pallas_call(
        kernel,
        out_shape=jax.ShapeDtypeStruct((rows, width), dtype),
        grid_spec=pltpu.PrefetchScalarGridSpec(
            num_scalar_prefetch=0,
            grid=grid,
            in_specs=[pl.BlockSpec((block_rows, width), lambda i: (i, 0))],
            out_specs=pl.BlockSpec((block_rows, width), lambda i: (i, 0)),
        ),
        # Same-index in/out BlockSpecs: block i is fully read before it is
        # written back, so in-place aliasing is safe.
        input_output_aliases={0: 0},
        compiler_params=pltpu.CompilerParams(
            dimension_semantics=("parallel",),
            vmem_limit_bytes=vmem_limit,
        ),
        cost_estimate=pl.CostEstimate(
            flops=2 * n,                 # one max + one min per element
            transcendentals=0,
            bytes_accessed=2 * n * itemsize,
        ),
    )(logx.reshape(rows, width))

    return out2d.reshape(logx.shape), y


if __name__ == "__main__":
    key = jax.random.PRNGKey(0)
    k1, k2, k3, k4, k5 = jax.random.split(key, 5)

    # 1) Module-sized input (batch=2, channels=4, 16x16 features); force the
    #    Pallas path (default would take the tiny-tensor fast path).
    x = jax.random.normal(k1, (2, 4, 16, 16), dtype=jnp.float32) * 10.0
    y = jax.random.normal(k2, (2, 16), dtype=jnp.float32)
    out_x, out_y = clamp_pallas(x, y, value=6.0, min_pallas_bytes=0)
    jax.block_until_ready(out_x)
    ref = jnp.clip(x, -6.0, 6.0)
    assert out_x.shape == x.shape and out_x.dtype == x.dtype
    assert jnp.array_equal(out_x, ref)
    assert out_y is y

    # Default behavior on the same tiny tensor (XLA fast path) + y=None.
    out_x2, out_y2 = clamp_pallas(x, None, value=6.0)
    jax.block_until_ready(out_x2)
    assert out_y2 is None
    assert jnp.array_equal(out_x2, ref)

    # 2) Larger f32 tensor -> multi-step tiled path (>= 4 even grid steps).
    xl = jax.random.normal(k3, (2, 4, 512, 512), dtype=jnp.float32) * 10.0
    ol, _ = clamp_pallas(xl, None, value=6.0)
    jax.block_until_ready(ol)
    assert jnp.array_equal(ol, jnp.clip(xl, -6.0, 6.0))

    # 3) bf16 tensor with a ragged trailing row-block (dtype-aware sublanes).
    xb = (jax.random.normal(k4, (300, 64, 64), dtype=jnp.float32) * 10.0).astype(jnp.bfloat16)
    ob, _ = clamp_pallas(xb, None, value=6.0)
    jax.block_until_ready(ob)
    assert ob.dtype == jnp.bfloat16
    assert jnp.array_equal(ob, jnp.clip(xb, -6.0, 6.0))

    # 4) Odd-size tensor (n % 128 != 0) -> fused-XLA clip fallback, no padding.
    xo = jax.random.normal(k5, (3, 5, 17), dtype=jnp.float32) * 10.0
    oo, _ = clamp_pallas(xo, None, value=6.0, min_pallas_bytes=0)
    jax.block_until_ready(oo)
    assert oo.shape == xo.shape
    assert jnp.array_equal(oo, jnp.clip(xo, -6.0, 6.0))

    print("KERNEL_OK")
</pallas_src>

<mosaic_0001>
module attributes {stable_mosaic.version = 11 : i64} {
  func.func @_clamp_kernel(%arg0: i32, %arg1: memref<1x2048xf32, #tpu.memory_space<vmem>>, %arg2: memref<1x2048xf32, #tpu.memory_space<vmem>>) attributes {dimension_semantics = [#tpu.dimension_semantics<parallel>], iteration_bounds = array<i64: 1>, scalar_prefetch = 0 : i64, scratch_operands = 0 : i64, tpu.core_type = #tpu.core_type<tc>, window_params = [{transform_indices = @transform_0, window_bounds = array<i64: 1, 2048>}, {transform_indices = @transform_1, window_bounds = array<i64: 1, 2048>}]} {
    %c0 = arith.constant 0 : index
    %c0_0 = arith.constant 0 : index
    %0 = vector.load %arg1[%c0, %c0_0] : memref<1x2048xf32, #tpu.memory_space<vmem>>, vector<1x2048xf32>
    %cst = arith.constant 0.000000e+00 : f32
    %cst_1 = arith.constant 6.000000e+00 : f32
    %1 = arith.subf %cst, %cst_1 : f32
    %cst_2 = arith.constant 6.000000e+00 : f32
    %2 = vector.broadcast %1 : f32 to vector<1x2048xf32>
    %3 = arith.maximumf %2, %0 : vector<1x2048xf32>
    %4 = vector.broadcast %cst_2 : f32 to vector<1x2048xf32>
    %5 = arith.minimumf %4, %3 : vector<1x2048xf32>
    %c0_3 = arith.constant 0 : index
    %c0_4 = arith.constant 0 : index
    %6 = vector.load %arg2[%c0_3, %c0_4] : memref<1x2048xf32, #tpu.memory_space<vmem>>, vector<1x2048xf32>
    tpu.vector_store %arg2[%c0_3, %c0_4], %5 {strides = array<i32>} : memref<1x2048xf32, #tpu.memory_space<vmem>>, vector<1x2048xf32>,
    return
  }
  func.func @transform_0(%arg0: i32) -> (i32, i32) {
    %c0_i32 = arith.constant 0 : i32
    %c0_i32_0 = arith.constant 0 : i32
    return %arg0, %c0_i32 : i32, i32
  }
  func.func @transform_1(%arg0: i32) -> (i32, i32) {
    %c0_i32 = arith.constant 0 : i32
    %c0_i32_0 = arith.constant 0 : i32
    return %arg0, %c0_i32 : i32, i32
  }
}

</mosaic_0001>

<llo_original>
// kernel: tpu_custom_call.1
$region0: #{tpu_custom_call.1}
  #allocation0 [shape = 'u32[]', space=smem, size = 0x4, offset = 0x4, fixed_abs, tag = 'smem constant byte address 0x4 - core index']
  #allocation1 [shape = 'u32[144,128]{1,0:T(1,128)}', space=vmem, size = 0x12000, scoped, tag = 'internal scratch']
  %s0 = inlined_call_operand.hbm [shape: f32[1,2048], index: 0, kind: input, shape index: {}, may-alias: {0,1}]
  %s1 = inlined_call_operand.hbm [shape: f32[1,2048], index: 1, kind: output, shape index: {}, may-alias: {0,1}]
  %s2 = sld [smem:[#allocation0]]
  $region18: #{tpu_custom_call.1} parent=0
    _
  %s4 = ssub.s32 1, %s2
  %s5 = scalar_select 0, %s4, %s2
  $region1: #{tpu_custom_call.1} parent=0
    #allocation2 [shape = 'u8[8192]{0}', space=vmem, size = 0x2000, scoped, tag = 'input window, operand 0, single buffered']
    #allocation3 [shape = 's32[1]{0}', space=sflag, size = 0x4, scoped, tag = 'scoped memory for tpu_custom_call.1']
    #allocation4 [shape = 's32[1]{0}', space=sflag, size = 0x4, scoped, tag = 'scoped memory for tpu_custom_call.1']
    #allocation5 [shape = 'u8[8192]{0}', space=vmem, size = 0x2000, scoped, tag = 'output window, operand 0, single buffered']
    %6 = vsyncpa [#allocation3], 0
    %7 = vsyncpa [#allocation4], 0
    // Predicated region
    $region2: #{tpu_custom_call.1} parent=1 // pred_check
      _
    $region3: #{tpu_custom_call.1} parent=1 // pred_check_branch
      %9 = sbr.rel (0) target = $region5
    $region4: #{tpu_custom_call.1} parent=1 // pred_region
      %s11 = ssub.s32 256, 256
      %12 = vsyncadd [#allocation3], %s11
      %s14 = sshll.u32 [#allocation2], 4
      %s15 = int_to_ptr.vmem [resolvable:$true] %s14
      %17 = dma.hbm_to_vmem [thread:$0]  %s0, 256, %s15, [#allocation3]
    $region5: #{tpu_custom_call.1} parent=1 // pred_fallthru
      _
    // Predicated region
    $region6: #{tpu_custom_call.1} parent=1 // pred_check
      _
    $region7: #{tpu_custom_call.1} parent=1 // pred_check_branch
      %19 = sbr.rel (0) target = $region9
    $region8: #{tpu_custom_call.1} parent=1 // pred_region
      %20 = dma.done [#allocation3], 256
    $region9: #{tpu_custom_call.1} parent=1 // pred_fallthru
      _
    %v21 = vld [vmem:[#allocation2] sm:$0xff]
    %v22 = vld [vmem:[#allocation2 + $0x8] sm:$0xff]
    %v23 = vmax.f32 %v21, -6.0
    %v24 = vmax.f32 %v22, -6.0
    %v25 = vmin.f32 %v23, 6.0
    %v26 = vmin.f32 %v24, 6.0
    %27 = vst [vmem:[#allocation5] sm:$0xff] %v25
    %28 = vst [vmem:[#allocation5 + $0x8] sm:$0xff] %v26
    // Predicated region
    $region10: #{tpu_custom_call.1} parent=1 // pred_check
      _
    $region11: #{tpu_custom_call.1} parent=1 // pred_check_branch
      %30 = sbr.rel (0) target = $region13
    $region12: #{tpu_custom_call.1} parent=1 // pred_region
      %s32 = ssub.s32 256, 256
      %33 = vsyncadd [#allocation4], %s32
      %s35 = sshll.u32 [#allocation5], 4
      %s36 = int_to_ptr.vmem [resolvable:$true] %s35
      %38 = dma.vmem_to_hbm [thread:$0]  %s36, 256, %s1, [#allocation4]
    $region13: #{tpu_custom_call.1} parent=1 // pred_fallthru
      _
    // Predicated region
    $region14: #{tpu_custom_call.1} parent=1 // pred_check
      _
    $region15: #{tpu_custom_call.1} parent=1 // pred_check_branch
      %40 = sbr.rel (0) target = $region17
    $region16: #{tpu_custom_call.1} parent=1 // pred_region
      %41 = dma.done [#allocation4], 256
    $region17: #{tpu_custom_call.1} parent=1 // pred_fallthru
      _
    %42 = vsyncpa [#allocation3], 1
    %43 = vsyncpa [#allocation4], 1

</llo_original>
